<compile_context>
chip_gen: v7x
topology: tpu7x:2x2x1
jax: 0.10.0
libtpu: 0.0.40
codegen_flags: <defaults>
</compile_context>

<pallas_src>
import functools

import jax
import jax.numpy as jnp
from jax.experimental import pallas as pl
from jax.experimental.pallas import tpu as pltpu


def mlp_kernel(x_t_ref, params_ref, b2_ref, o_ref):
    # x_t_ref   : (D_in, TB)        VMEM -- batch tile, batch on lanes
    # params_ref: (H_pad, D_in + 2) VMEM -- [ w1^T | b1 | w2 ], resident
    # b2_ref    : (1, 1)            SMEM -- fc2 bias scalar
    # o_ref     : (1, TB)           VMEM -- lane-dense output row
    d_in = x_t_ref.shape[0]

    params = params_ref[...]                       # (H_pad, D_in + 2), tiny
    w1t = params[:, :d_in]                         # (H_pad, D_in)
    b1c = params[:, d_in:d_in + 1]                 # (H_pad, 1)
    w2c = params[:, d_in + 1:d_in + 2]             # (H_pad, 1)

    # fc1 on the MXU, canonical (M,K)x(K,N):  h_T = tanh(W1 @ x^T + b1)
    # Both operands are lane-dense on arrival; result keeps batch on lanes.
    h_t = jnp.dot(w1t, x_t_ref[...], preferred_element_type=jnp.float32)
    h_t = jnp.tanh(h_t + b1c)                      # (H_pad, TB)

    # fc2 ((H, 1) matmul) on VPU + XLU: elementwise scale by w2 then a
    # sublane reduction over the hidden axis -> lane-dense (1, TB).
    y_row = jnp.sum(h_t * w2c, axis=0, keepdims=True)
    y_row = jax.nn.sigmoid(y_row + b2_ref[0, 0])

    o_ref[...] = y_row.astype(o_ref.dtype)         # unmasked, lane-dense store


@functools.partial(jax.jit, static_argnames=("num_tiles", "h_pad"))
def pytorch_nn_forward(x, w1, b1, w2, b2, *, num_tiles=1, h_pad=8):
    """Forward pass of PyTorchNN: sigmoid(tanh(x @ w1 + b1) @ w2 + b2).

    x : (B, D_in) f32
    w1: (D_in, H) f32   (nn.Linear fc1 weight, pre-transposed)
    b1: (1, H)    f32
    w2: (H, 1)    f32   (nn.Linear fc2 weight, pre-transposed)
    b2: (1, 1)    f32
    num_tiles: grid steps over the batch.  1 for v5e/v6e (single TensorCore),
               2 for v7x (one "parallel" tile per TensorCore).
    returns: (B, 1) f32
    """
    B, d_in = x.shape
    H = w1.shape[1]
    out_dim = w2.shape[1]

    # Batch tile, rounded up to a lane-aligned multiple of 128.
    tb = ((pl.cdiv(B, num_tiles) + 127) // 128) * 128
    b_padded = num_tiles * tb

    # Batch on lanes: (D_in, B) -- a tiny wrapper-side XLA transpose.
    x_t = x.T
    if b_padded != B:
        x_t = jnp.pad(x_t, ((0, 0), (0, b_padded - B)))

    # Pack all small parameters into one resident VMEM operand:
    #   cols [0, d_in)      = w1^T   (zero-padded H -> h_pad)
    #   col  d_in           = b1
    #   col  d_in + 1       = w2
    params = jnp.zeros((h_pad, d_in + 2), jnp.float32)
    params = params.at[:H, :d_in].set(w1.T)
    params = params.at[:H, d_in].set(b1.reshape(-1))
    params = params.at[:H, d_in + 1].set(w2.reshape(-1))
    b2_s = b2.reshape(1, 1).astype(jnp.float32)

    flops = 2 * b_padded * d_in * h_pad + 2 * b_padded * h_pad
    transcendentals = b_padded * (h_pad + 1)
    bytes_accessed = 4 * (b_padded * d_in + b_padded + h_pad * (d_in + 2) + 1)

    out = pl.pallas_call(
        mlp_kernel,
        out_shape=jax.ShapeDtypeStruct((1, b_padded), jnp.float32),
        grid=(num_tiles,),
        in_specs=[
            # x^T: one lane-dense (D_in, TB) tile per grid step.
            pl.BlockSpec((d_in, tb), lambda i: (0, i), memory_space=pltpu.VMEM),
            # Packed params: constant index_map -> fetched once, stays resident.
            pl.BlockSpec((h_pad, d_in + 2), lambda i: (0, 0),
                         memory_space=pltpu.VMEM),
            # b2: scalar in SMEM (no padded VMEM tile, no vld slot).
            pl.BlockSpec(memory_space=pltpu.SMEM),
        ],
        out_specs=pl.BlockSpec((1, tb), lambda i: (0, i),
                               memory_space=pltpu.VMEM),
        compiler_params=pltpu.CompilerParams(
            dimension_semantics=("parallel",)),
        cost_estimate=pl.CostEstimate(
            flops=flops,
            transcendentals=transcendentals,
            bytes_accessed=bytes_accessed),
    )(x_t, params, b2_s)

    # Lane-dense (1, b_padded) slab -> (B, 1); pure layout plumbing.
    return out.reshape(b_padded)[:B].reshape(B, out_dim)


def _pick_num_tiles():
    """1 grid step on single-TensorCore chips (v5e/v6e), 2 on v7x."""
    try:
        kind = jax.devices()[0].device_kind.lower()
        if "v7" in kind:
            return 2
    except Exception:
        pass
    return 1


if __name__ == "__main__":
    # Module shapes: input_size = X_train.shape[1] (take 8), hidden_size = 6,
    # output_size = 1.  Batch = 2048 so the batch tiling / lane-dense layout
    # is exercised while the whole problem is still ~64 KiB of input data.
    batch = 2048
    input_size = 8
    hidden_size = 6
    output_size = 1

    key = jax.random.PRNGKey(0)
    kx, kw1, kb1, kw2, kb2 = jax.random.split(key, 5)

    x = jax.random.normal(kx, (batch, input_size), dtype=jnp.float32)

    # Deterministic init mimicking nn.Linear's uniform(-1/sqrt(fan_in), ...).
    bound1 = 1.0 / (input_size ** 0.5)
    w1 = jax.random.uniform(kw1, (input_size, hidden_size), jnp.float32, -bound1, bound1)
    b1 = jax.random.uniform(kb1, (1, hidden_size), jnp.float32, -bound1, bound1)
    bound2 = 1.0 / (hidden_size ** 0.5)
    w2 = jax.random.uniform(kw2, (hidden_size, output_size), jnp.float32, -bound2, bound2)
    b2 = jax.random.uniform(kb2, (1, output_size), jnp.float32, -bound2, bound2)

    out = pytorch_nn_forward(x, w1, b1, w2, b2, num_tiles=_pick_num_tiles())
    out = jax.block_until_ready(out)

    # Pure-JAX reference check.
    ref = jax.nn.sigmoid(jnp.tanh(x @ w1 + b1) @ w2 + b2)
    assert out.shape == (batch, output_size)
    assert jnp.allclose(out, ref, atol=3e-5, rtol=3e-5), "mismatch vs reference"

    print("KERNEL_OK")
</pallas_src>

<mosaic_0001>
module attributes {stable_mosaic.version = 11 : i64} {
  func.func @mlp_kernel(%arg0: i32, %arg1: memref<8x2048xf32, #tpu.memory_space<vmem>>, %arg2: memref<8x10xf32, #tpu.memory_space<vmem>>, %arg3: memref<1x1xf32, #tpu.memory_space<smem>>, %arg4: memref<1x2048xf32, #tpu.memory_space<vmem>>) attributes {dimension_semantics = [#tpu.dimension_semantics<parallel>], iteration_bounds = array<i64: 1>, scalar_prefetch = 0 : i64, scratch_operands = 0 : i64, tpu.core_type = #tpu.core_type<tc>, window_params = [{transform_indices = @transform_0, window_bounds = array<i64: 8, 2048>}, {pipeline_mode = #tpu.pipeline_mode<synchronous>, transform_indices = @transform_1, window_bounds = array<i64: 8, 10>}, {transform_indices = @transform_2, window_bounds = array<i64: 1, 1>}, {transform_indices = @transform_3, window_bounds = array<i64: 1, 2048>}]} {
    %c0 = arith.constant 0 : index
    %c0_0 = arith.constant 0 : index
    %0 = vector.load %arg2[%c0, %c0_0] : memref<8x10xf32, #tpu.memory_space<vmem>>, vector<8x10xf32>
    %1 = vector.extract_strided_slice %0 {offsets = [0, 0], sizes = [8, 8], strides = [1, 1]} : vector<8x10xf32> to vector<8x8xf32>
    %2 = vector.extract_strided_slice %0 {offsets = [0, 8], sizes = [8, 1], strides = [1, 1]} : vector<8x10xf32> to vector<8x1xf32>
    %3 = vector.extract_strided_slice %0 {offsets = [0, 9], sizes = [8, 1], strides = [1, 1]} : vector<8x10xf32> to vector<8x1xf32>
    %c0_1 = arith.constant 0 : index
    %c0_2 = arith.constant 0 : index
    %4 = vector.load %arg1[%c0_1, %c0_2] : memref<8x2048xf32, #tpu.memory_space<vmem>>, vector<8x2048xf32>
    %cst = arith.constant dense<0.000000e+00> : vector<8x2048xf32>
    %5 = tpu.matmul %1, %4, %cst {dimension_numbers = #tpu.dot_dimension_numbers<[1], [0], [0], [1], [0, 0, 1, 1], [], []>} : vector<8x8xf32>, vector<8x2048xf32>, vector<8x2048xf32> -> vector<8x2048xf32>
    %6 = vector.broadcast %2 : vector<8x1xf32> to vector<8x2048xf32>
    %7 = arith.addf %5, %6 : vector<8x2048xf32>
    %8 = math.tanh %7 : vector<8x2048xf32>
    %9 = vector.broadcast %3 : vector<8x1xf32> to vector<8x2048xf32>
    %10 = arith.mulf %8, %9 : vector<8x2048xf32>
    %cst_3 = arith.constant dense<0.000000e+00> : vector<2048xf32>
    %11 = vector.multi_reduction <add>, %10, %cst_3 [0] : vector<8x2048xf32> to vector<2048xf32>
    %12 = vector.shape_cast %11 : vector<2048xf32> to vector<1x2048xf32>
    %c0_4 = arith.constant 0 : index
    %c0_5 = arith.constant 0 : index
    %13 = memref.load %arg3[%c0_4, %c0_5] : memref<1x1xf32, #tpu.memory_space<smem>>
    %14 = vector.broadcast %13 : f32 to vector<1x2048xf32>
    %15 = arith.addf %12, %14 : vector<1x2048xf32>
    %16 = arith.negf %15 : vector<1x2048xf32>
    %17 = math.exp %16 : vector<1x2048xf32>
    %cst_6 = arith.constant 1.000000e+00 : f32
    %18 = vector.broadcast %cst_6 : f32 to vector<1x2048xf32>
    %19 = arith.addf %18, %17 : vector<1x2048xf32>
    %20 = arith.divf %18, %19 : vector<1x2048xf32>
    %c0_7 = arith.constant 0 : index
    %c0_8 = arith.constant 0 : index
    %21 = vector.load %arg4[%c0_7, %c0_8] : memref<1x2048xf32, #tpu.memory_space<vmem>>, vector<1x2048xf32>
    tpu.vector_store %arg4[%c0_7, %c0_8], %20 {strides = array<i32>} : memref<1x2048xf32, #tpu.memory_space<vmem>>, vector<1x2048xf32>,
    return
  }
  func.func @transform_0(%arg0: i32) -> (i32, i32) {
    %c0_i32 = arith.constant 0 : i32
    %c0_i32_0 = arith.constant 0 : i32
    return %c0_i32, %arg0 : i32, i32
  }
  func.func @transform_1(%arg0: i32) -> (i32, i32) {
    %c0_i32 = arith.constant 0 : i32
    %c0_i32_0 = arith.constant 0 : i32
    %c0_i32_1 = arith.constant 0 : i32
    return %c0_i32, %c0_i32_0 : i32, i32
  }
  func.func @transform_2(%arg0: i32) -> (i32, i32) {
    %c0_i32 = arith.constant 0 : i32
    %c0_i32_0 = arith.constant 0 : i32
    %c0_i32_1 = arith.constant 0 : i32
    return %c0_i32, %c0_i32_0 : i32, i32
  }
  func.func @transform_3(%arg0: i32) -> (i32, i32) {
    %c0_i32 = arith.constant 0 : i32
    %c0_i32_0 = arith.constant 0 : i32
    return %c0_i32, %arg0 : i32, i32
  }
}

</mosaic_0001>

<llo_original>
// kernel: pytorch_nn_forward.1
$region0: #{pytorch_nn_forward.1}
  #allocation0 [shape = 'u32[]', space=smem, size = 0x4, offset = 0x4, fixed_abs, tag = 'smem constant byte address 0x4 - core index']
  #allocation1 [shape = 'u32[144,128]{1,0:T(1,128)}', space=vmem, size = 0x12000, scoped, tag = 'internal scratch']
  #allocation2 [shape = 'f32[1,1]{1,0:T(1,128)S(6)}', space=smem, size = 0x200, scoped, tag = 'scoped memory for pytorch_nn_forward.1']
  %s0 = inlined_call_operand.vmem [shape: f32[8,2048], index: 0, kind: input, shape index: {}]
  %s1 = inlined_call_operand.vmem [shape: f32[8,10], index: 1, kind: input, shape index: {}]
  %s2 = inlined_call_operand.<no memory space> [shape: f32[1,1], index: 2, kind: input, shape index: {}]
  %s3 = inlined_call_operand.hbm [shape: f32[1,2048], index: 3, kind: output, shape index: {}]
  %s4 = sld [smem:[#allocation0]]
  $region22: #{pytorch_nn_forward.1} parent=0
    _
  %s6 = ssub.s32 1, %s4
  %s7 = scalar_select 0, %s6, %s4
  %8 = sst [smem:[#allocation2]] %s2
  $region1: #{pytorch_nn_forward.1} parent=0
    #allocation3 [shape = 'u8[8192]{0}', space=vmem, size = 0x2000, scoped, tag = 'output window, operand 0, single buffered']
    #allocation4 [shape = 's32[1]{0}', space=sflag, size = 0x4, scoped, tag = 'scoped memory for pytorch_nn_forward.1']
    %9 = vsyncpa [#allocation4], 0
    // Predicated region
    $region2: #{pytorch_nn_forward.1} parent=1 // pred_check
      _
    $region3: #{pytorch_nn_forward.1} parent=1 // pred_check_branch
      %11 = sbr.rel (0) target = $region5
    $region4: #{pytorch_nn_forward.1} parent=1 // pred_region
      _
    $region5: #{pytorch_nn_forward.1} parent=1 // pred_fallthru
      _
    // Predicated region
    $region6: #{pytorch_nn_forward.1} parent=1 // pred_check
      _
    $region7: #{pytorch_nn_forward.1} parent=1 // pred_check_branch
      %13 = sbr.rel (0) target = $region9
    $region8: #{pytorch_nn_forward.1} parent=1 // pred_region
      _
    $region9: #{pytorch_nn_forward.1} parent=1 // pred_fallthru
      _
    // Predicated region
    $region10: #{pytorch_nn_forward.1} parent=1 // pred_check
      _
    $region11: #{pytorch_nn_forward.1} parent=1 // pred_check_branch
      %15 = sbr.rel (0) target = $region13
    $region12: #{pytorch_nn_forward.1} parent=1 // pred_region
      _
    $region13: #{pytorch_nn_forward.1} parent=1 // pred_fallthru
      _
    %v16 = vld [vmem:[%s1] sm:$0xff]
    %v17 = vld [vmem:[%s0] sm:$0xff]
    %v18 = vld [vmem:[%s0 + $0x8] sm:$0xff]
    %v19 = vld [vmem:[%s0 + $0x10] sm:$0xff]
    %v20 = vld [vmem:[%s0 + $0x18] sm:$0xff]
    %v21 = vld [vmem:[%s0 + $0x20] sm:$0xff]
    %v22 = vld [vmem:[%s0 + $0x28] sm:$0xff]
    %v23 = vld [vmem:[%s0 + $0x30] sm:$0xff]
    %v24 = vld [vmem:[%s0 + $0x38] sm:$0xff]
    %v25 = vld [vmem:[%s0 + $0x40] sm:$0xff]
    %v26 = vld [vmem:[%s0 + $0x48] sm:$0xff]
    %v27 = vld [vmem:[%s0 + $0x50] sm:$0xff]
    %v28 = vld [vmem:[%s0 + $0x58] sm:$0xff]
    %v29 = vld [vmem:[%s0 + $0x60] sm:$0xff]
    %v30 = vld [vmem:[%s0 + $0x68] sm:$0xff]
    %v31 = vld [vmem:[%s0 + $0x70] sm:$0xff]
    %v32 = vld [vmem:[%s0 + $0x78] sm:$0xff]
    %34 = vset.pattern.permute.xlu0 8
    %35 = vperm.xlu0 %34, %v16
    %v36 = vpop.permute.xlu0 %35
    %vm38 = vcmask 64512
    %v39 = vsel %vm38, %v16, 0
    %41 = vmatprep.subr.mxu0 %v18
    %42 = vmatpush1.msra.mxu0 %v17
    %43 = vmatprep.subr.mxu0 0.0
    %44 = vmatpush1.msra.mxu0 0.0
    %45 = vmatprep.subr.mxu0 0.0
    %46 = vmatpush1.msra.mxu0 0.0
    %47 = vmatprep.subr.mxu0 0.0
    %48 = vmatpush1.msra.mxu0 0.0
    %49 = vmatprep.subr.mxu0 0.0
    %50 = vmatpush1.msra.mxu0 0.0
    %51 = vmatprep.subr.mxu0 0.0
    %52 = vmatpush1.msra.mxu0 0.0
    %53 = vmatprep.subr.mxu0 0.0
    %54 = vmatpush1.msra.mxu0 0.0
    %55 = vmatprep.subr.mxu0 0.0
    %56 = vmatpush1.msra.mxu0 0.0
    %57 = vmatprep.subr.mxu0 0.0
    %58 = vmatpush1.msra.mxu0 0.0
    %59 = vmatprep.subr.mxu0 0.0
    %60 = vmatpush1.msra.mxu0 0.0
    %61 = vmatprep.subr.mxu0 0.0
    %62 = vmatpush1.msra.mxu0 0.0
    %63 = vmatprep.subr.mxu0 0.0
    %64 = vmatpush1.msra.mxu0 0.0
    %65 = vmatprep.subr.mxu0 0.0
    %66 = vmatpush1.msra.mxu0 0.0
    %67 = vmatprep.subr.mxu0 0.0
    %68 = vmatpush1.msra.mxu0 0.0
    %69 = vmatprep.subr.mxu0 0.0
    %70 = vmatpush1.msra.mxu0 0.0
    %71 = vmatprep.subr.mxu0 0.0
    %72 = vmatpush1.msra.mxu0 0.0
    %73 = vmatprep.subr.mxu0 0.0
    %74 = vmatpush1.msra.mxu0 0.0
    %75 = vmatprep.subr.mxu0 0.0
    %76 = vmatpush1.msra.mxu0 0.0
    %77 = vmatprep.subr.mxu0 0.0
    %78 = vmatpush1.msra.mxu0 0.0
    %79 = vmatprep.subr.mxu0 0.0
    %80 = vmatpush1.msra.mxu0 0.0
    %81 = vmatprep.subr.mxu0 0.0
    %82 = vmatpush1.msra.mxu0 0.0
    %83 = vmatprep.subr.mxu0 0.0
    %84 = vmatpush1.msra.mxu0 0.0
    %85 = vmatprep.subr.mxu0 0.0
    %86 = vmatpush1.msra.mxu0 0.0
    %87 = vmatprep.subr.mxu0 0.0
    %88 = vmatpush1.msra.mxu0 0.0
    %89 = vmatprep.subr.mxu0 0.0
    %90 = vmatpush1.msra.mxu0 0.0
    %91 = vmatprep.subr.mxu0 0.0
    %92 = vmatpush1.msra.mxu0 0.0
    %93 = vmatprep.subr.mxu0 0.0
    %94 = vmatpush1.msra.mxu0 0.0
    %95 = vmatprep.subr.mxu0 0.0
    %96 = vmatpush1.msra.mxu0 0.0
    %97 = vmatprep.subr.mxu0 0.0
    %98 = vmatpush1.msra.mxu0 0.0
    %99 = vmatprep.subr.mxu0 0.0
    %100 = vmatpush1.msra.mxu0 0.0
    %101 = vmatprep.subr.mxu0 0.0
    %102 = vmatpush1.msra.mxu0 0.0
    %103 = vmatprep.subr.mxu0 0.0
    %104 = vmatpush1.msra.mxu0 0.0
    %105 = vmatprep.mubr.f32.mxu0 0.0
    %106 = vmatmul.mubr.f32.gmra.mrb[0].mxu0 %v39
    %v107 = vpop.f32.mrb[0].mxu0
    %v108 = vadd.f32 %v36, %v107
    %v109 = vpop.f32.mrb[0].mxu0
    %v110 = vadd.f32 %v36, %v109
    %111 = vdwg.mxu0
    %112 = vmatprep.subr.mxu0 %v20
    %113 = vmatpush1.msra.mxu0 %v19
    %114 = vmatprep.subr.mxu0 0.0
    %115 = vmatpush1.msra.mxu0 0.0
    %116 = vmatprep.subr.mxu0 0.0
    %117 = vmatpush1.msra.mxu0 0.0
    %118 = vmatprep.subr.mxu0 0.0
    %119 = vmatpush1.msra.mxu0 0.0
    %120 = vmatprep.subr.mxu0 0.0
    %121 = vmatpush1.msra.mxu0 0.0
    %122 = vmatprep.subr.mxu0 0.0
    %123 = vmatpush1.msra.mxu0 0.0
    %124 = vmatprep.subr.mxu0 0.0
    %125 = vmatpush1.msra.mxu0 0.0
    %126 = vmatprep.subr.mxu0 0.0
    %127 = vmatpush1.msra.mxu0 0.0
    %128 = vmatprep.subr.mxu0 0.0
    %129 = vmatpush1.msra.mxu0 0.0
    %130 = vmatprep.subr.mxu0 0.0
    %131 = vmatpush1.msra.mxu0 0.0
    %132 = vmatprep.subr.mxu0 0.0
    %133 = vmatpush1.msra.mxu0 0.0
    %134 = vmatprep.subr.mxu0 0.0
    %135 = vmatpush1.msra.mxu0 0.0
    %136 = vmatprep.subr.mxu0 0.0
    %137 = vmatpush1.msra.mxu0 0.0
    %138 = vmatprep.subr.mxu0 0.0
    %139 = vmatpush1.msra.mxu0 0.0
    %140 = vmatprep.subr.mxu0 0.0
    %141 = vmatpush1.msra.mxu0 0.0
    %142 = vmatprep.subr.mxu0 0.0
    %143 = vmatpush1.msra.mxu0 0.0
    %144 = vmatprep.subr.mxu0 0.0
    %145 = vmatpush1.msra.mxu0 0.0
    %146 = vmatprep.subr.mxu0 0.0
    %147 = vmatpush1.msra.mxu0 0.0
    %148 = vmatprep.subr.mxu0 0.0
    %149 = vmatpush1.msra.mxu0 0.0
    %150 = vmatprep.subr.mxu0 0.0
    %151 = vmatpush1.msra.mxu0 0.0
    %152 = vmatprep.subr.mxu0 0.0
    %153 = vmatpush1.msra.mxu0 0.0
    %154 = vmatprep.subr.mxu0 0.0
    %155 = vmatpush1.msra.mxu0 0.0
    %156 = vmatprep.subr.mxu0 0.0
    %157 = vmatpush1.msra.mxu0 0.0
    %158 = vmatprep.subr.mxu0 0.0
    %159 = vmatpush1.msra.mxu0 0.0
    %160 = vmatprep.subr.mxu0 0.0
    %161 = vmatpush1.msra.mxu0 0.0
    %162 = vmatprep.subr.mxu0 0.0
    %163 = vmatpush1.msra.mxu0 0.0
    %164 = vmatprep.subr.mxu0 0.0
    %165 = vmatpush1.msra.mxu0 0.0
    %166 = vmatprep.subr.mxu0 0.0
    %167 = vmatpush1.msra.mxu0 0.0
    %168 = vmatprep.subr.mxu0 0.0
    %169 = vmatpush1.msra.mxu0 0.0
    %170 = vmatprep.subr.mxu0 0.0
    %171 = vmatpush1.msra.mxu0 0.0
    %172 = vmatprep.subr.mxu0 0.0
    %173 = vmatpush1.msra.mxu0 0.0
    %174 = vmatprep.subr.mxu0 0.0
    %175 = vmatpush1.msra.mxu0 0.0
    %176 = vmatprep.mubr.f32.mxu0 0.0
    %177 = vmatmul.mubr.f32.gmra.mrb[0].mxu0 %v39
    %v178 = vpop.f32.mrb[0].mxu0
    %v179 = vadd.f32 %v36, %v178
    %v180 = vpop.f32.mrb[0].mxu0
    %v181 = vadd.f32 %v36, %v180
    %182 = vdwg.mxu0
    %183 = vmatprep.subr.mxu0 %v22
    %184 = vmatpush1.msra.mxu0 %v21
    %185 = vmatprep.subr.mxu0 0.0
    %186 = vmatpush1.msra.mxu0 0.0
    %187 = vmatprep.subr.mxu0 0.0
    %188 = vmatpush1.msra.mxu0 0.0
    %189 = vmatprep.subr.mxu0 0.0
    %190 = vmatpush1.msra.mxu0 0.0
    %191 = vmatprep.subr.mxu0 0.0
    %192 = vmatpush1.msra.mxu0 0.0
    %193 = vmatprep.subr.mxu0 0.0
    %194 = vmatpush1.msra.mxu0 0.0
    %195 = vmatprep.subr.mxu0 0.0
    %196 = vmatpush1.msra.mxu0 0.0
    %197 = vmatprep.subr.mxu0 0.0
    %198 = vmatpush1.msra.mxu0 0.0
    %199 = vmatprep.subr.mxu0 0.0
    %200 = vmatpush1.msra.mxu0 0.0
    %201 = vmatprep.subr.mxu0 0.0
    %202 = vmatpush1.msra.mxu0 0.0
    %203 = vmatprep.subr.mxu0 0.0
    %204 = vmatpush1.msra.mxu0 0.0
    %205 = vmatprep.subr.mxu0 0.0
    %206 = vmatpush1.msra.mxu0 0.0
    %207 = vmatprep.subr.mxu0 0.0
    %208 = vmatpush1.msra.mxu0 0.0
    %209 = vmatprep.subr.mxu0 0.0
    %210 = vmatpush1.msra.mxu0 0.0
    %211 = vmatprep.subr.mxu0 0.0
    %212 = vmatpush1.msra.mxu0 0.0
    %213 = vmatprep.subr.mxu0 0.0
    %214 = vmatpush1.msra.mxu0 0.0
    %215 = vmatprep.subr.mxu0 0.0
    %216 = vmatpush1.msra.mxu0 0.0
    %217 = vmatprep.subr.mxu0 0.0
    %218 = vmatpush1.msra.mxu0 0.0
    %219 = vmatprep.subr.mxu0 0.0
    %220 = vmatpush1.msra.mxu0 0.0
    %221 = vmatprep.subr.mxu0 0.0
    %222 = vmatpush1.msra.mxu0 0.0
    %223 = vmatprep.subr.mxu0 0.0
    %224 = vmatpush1.msra.mxu0 0.0
    %225 = vmatprep.subr.mxu0 0.0
    %226 = vmatpush1.msra.mxu0 0.0
    %227 = vmatprep.subr.mxu0 0.0
    %228 = vmatpush1.msra.mxu0 0.0
    %229 = vmatprep.subr.mxu0 0.0
    %230 = vmatpush1.msra.mxu0 0.0
    %231 = vmatprep.subr.mxu0 0.0
    %232 = vmatpush1.msra.mxu0 0.0
    %233 = vmatprep.subr.mxu0 0.0
    %234 = vmatpush1.msra.mxu0 0.0
    %235 = vmatprep.subr.mxu0 0.0
    %236 = vmatpush1.msra.mxu0 0.0
    %237 = vmatprep.subr.mxu0 0.0
    %238 = vmatpush1.msra.mxu0 0.0
    %239 = vmatprep.subr.mxu0 0.0
    %240 = vmatpush1.msra.mxu0 0.0
    %241 = vmatprep.subr.mxu0 0.0
    %242 = vmatpush1.msra.mxu0 0.0
    %243 = vmatprep.subr.mxu0 0.0
    %244 = vmatpush1.msra.mxu0 0.0
    %245 = vmatprep.subr.mxu0 0.0
    %246 = vmatpush1.msra.mxu0 0.0
    %247 = vmatprep.mubr.f32.mxu0 0.0
    %248 = vmatmul.mubr.f32.gmra.mrb[0].mxu0 %v39
    %v249 = vpop.f32.mrb[0].mxu0
    %v250 = vadd.f32 %v36, %v249
    %v251 = vpop.f32.mrb[0].mxu0
    %v252 = vadd.f32 %v36, %v251
    %253 = vdwg.mxu0
    %254 = vmatprep.subr.mxu0 %v24
    %255 = vmatpush1.msra.mxu0 %v23
    %256 = vmatprep.subr.mxu0 0.0
    %257 = vmatpush1.msra.mxu0 0.0
    %258 = vmatprep.subr.mxu0 0.0
    %259 = vmatpush1.msra.mxu0 0.0
    %260 = vmatprep.subr.mxu0 0.0
    %261 = vmatpush1.msra.mxu0 0.0
    %262 = vmatprep.subr.mxu0 0.0
    %263 = vmatpush1.msra.mxu0 0.0
    %264 = vmatprep.subr.mxu0 0.0
    %265 = vmatpush1.msra.mxu0 0.0
    %266 = vmatprep.subr.mxu0 0.0
    %267 = vmatpush1.msra.mxu0 0.0
    %268 = vmatprep.subr.mxu0 0.0
    %269 = vmatpush1.msra.mxu0 0.0
    %270 = vmatprep.subr.mxu0 0.0
    %271 = vmatpush1.msra.mxu0 0.0
    %272 = vmatprep.subr.mxu0 0.0
    %273 = vmatpush1.msra.mxu0 0.0
    %274 = vmatprep.subr.mxu0 0.0
    %275 = vmatpush1.msra.mxu0 0.0
    %276 = vmatprep.subr.mxu0 0.0
    %277 = vmatpush1.msra.mxu0 0.0
    %278 = vmatprep.subr.mxu0 0.0
    %279 = vmatpush1.msra.mxu0 0.0
    %280 = vmatprep.subr.mxu0 0.0
    %281 = vmatpush1.msra.mxu0 0.0
    %282 = vmatprep.subr.mxu0 0.0
    %283 = vmatpush1.msra.mxu0 0.0
    %284 = vmatprep.subr.mxu0 0.0
    %285 = vmatpush1.msra.mxu0 0.0
    %286 = vmatprep.subr.mxu0 0.0
    %287 = vmatpush1.msra.mxu0 0.0
    %288 = vmatprep.subr.mxu0 0.0
    %289 = vmatpush1.msra.mxu0 0.0
    %290 = vmatprep.subr.mxu0 0.0
    %291 = vmatpush1.msra.mxu0 0.0
    %292 = vmatprep.subr.mxu0 0.0
    %293 = vmatpush1.msra.mxu0 0.0
    %294 = vmatprep.subr.mxu0 0.0
    %295 = vmatpush1.msra.mxu0 0.0
    %296 = vmatprep.subr.mxu0 0.0
    %297 = vmatpush1.msra.mxu0 0.0
    %298 = vmatprep.subr.mxu0 0.0
    %299 = vmatpush1.msra.mxu0 0.0
    %300 = vmatprep.subr.mxu0 0.0
    %301 = vmatpush1.msra.mxu0 0.0
    %302 = vmatprep.subr.mxu0 0.0
    %303 = vmatpush1.msra.mxu0 0.0
    %304 = vmatprep.subr.mxu0 0.0
    %305 = vmatpush1.msra.mxu0 0.0
    %306 = vmatprep.subr.mxu0 0.0
    %307 = vmatpush1.msra.mxu0 0.0
    %308 = vmatprep.subr.mxu0 0.0
    %309 = vmatpush1.msra.mxu0 0.0
    %310 = vmatprep.subr.mxu0 0.0
    %311 = vmatpush1.msra.mxu0 0.0
    %312 = vmatprep.subr.mxu0 0.0
    %313 = vmatpush1.msra.mxu0 0.0
    %314 = vmatprep.subr.mxu0 0.0
    %315 = vmatpush1.msra.mxu0 0.0
    %316 = vmatprep.subr.mxu0 0.0
    %317 = vmatpush1.msra.mxu0 0.0
    %318 = vmatprep.mubr.f32.mxu0 0.0
    %319 = vmatmul.mubr.f32.gmra.mrb[0].mxu0 %v39
    %v320 = vpop.f32.mrb[0].mxu0
    %v321 = vadd.f32 %v36, %v320
    %v322 = vpop.f32.mrb[0].mxu0
    %v323 = vadd.f32 %v36, %v322
    %324 = vdwg.mxu0
    %325 = vmatprep.subr.mxu0 %v26
    %326 = vmatpush1.msra.mxu0 %v25
    %327 = vmatprep.subr.mxu0 0.0
    %328 = vmatpush1.msra.mxu0 0.0
    %329 = vmatprep.subr.mxu0 0.0
    %330 = vmatpush1.msra.mxu0 0.0
    %331 = vmatprep.subr.mxu0 0.0
    %332 = vmatpush1.msra.mxu0 0.0
    %333 = vmatprep.subr.mxu0 0.0
    %334 = vmatpush1.msra.mxu0 0.0
    %335 = vmatprep.subr.mxu0 0.0
    %336 = vmatpush1.msra.mxu0 0.0
    %337 = vmatprep.subr.mxu0 0.0
    %338 = vmatpush1.msra.mxu0 0.0
    %339 = vmatprep.subr.mxu0 0.0
    %340 = vmatpush1.msra.mxu0 0.0
    %341 = vmatprep.subr.mxu0 0.0
    %342 = vmatpush1.msra.mxu0 0.0
    %343 = vmatprep.subr.mxu0 0.0
    %344 = vmatpush1.msra.mxu0 0.0
    %345 = vmatprep.subr.mxu0 0.0
    %346 = vmatpush1.msra.mxu0 0.0
    %347 = vmatprep.subr.mxu0 0.0
    %348 = vmatpush1.msra.mxu0 0.0
    %349 = vmatprep.subr.mxu0 0.0
    %350 = vmatpush1.msra.mxu0 0.0
    %351 = vmatprep.subr.mxu0 0.0
    %352 = vmatpush1.msra.mxu0 0.0
    %353 = vmatprep.subr.mxu0 0.0
    %354 = vmatpush1.msra.mxu0 0.0
    %355 = vmatprep.subr.mxu0 0.0
    %356 = vmatpush1.msra.mxu0 0.0
    %357 = vmatprep.subr.mxu0 0.0
    %358 = vmatpush1.msra.mxu0 0.0
    %359 = vmatprep.subr.mxu0 0.0
    %360 = vmatpush1.msra.mxu0 0.0
    %361 = vmatprep.subr.mxu0 0.0
    %362 = vmatpush1.msra.mxu0 0.0
    %363 = vmatprep.subr.mxu0 0.0
    %364 = vmatpush1.msra.mxu0 0.0
    %365 = vmatprep.subr.mxu0 0.0
    %366 = vmatpush1.msra.mxu0 0.0
    %367 = vmatprep.subr.mxu0 0.0
    %368 = vmatpush1.msra.mxu0 0.0
    %369 = vmatprep.subr.mxu0 0.0
    %370 = vmatpush1.msra.mxu0 0.0
    %371 = vmatprep.subr.mxu0 0.0
    %372 = vmatpush1.msra.mxu0 0.0
    %373 = vmatprep.subr.mxu0 0.0
    %374 = vmatpush1.msra.mxu0 0.0
    %375 = vmatprep.subr.mxu0 0.0
    %376 = vmatpush1.msra.mxu0 0.0
    %377 = vmatprep.subr.mxu0 0.0
    %378 = vmatpush1.msra.mxu0 0.0
    %379 = vmatprep.subr.mxu0 0.0
    %380 = vmatpush1.msra.mxu0 0.0
    %381 = vmatprep.subr.mxu0 0.0
    %382 = vmatpush1.msra.mxu0 0.0
    %383 = vmatprep.subr.mxu0 0.0
    %384 = vmatpush1.msra.mxu0 0.0
    %385 = vmatprep.subr.mxu0 0.0
    %386 = vmatpush1.msra.mxu0 0.0
    %387 = vmatprep.subr.mxu0 0.0
    %388 = vmatpush1.msra.mxu0 0.0
    %389 = vmatprep.mubr.f32.mxu0 0.0
    %390 = vmatmul.mubr.f32.gmra.mrb[0].mxu0 %v39
    %v391 = vpop.f32.mrb[0].mxu0
    %v392 = vadd.f32 %v36, %v391
    %v393 = vpop.f32.mrb[0].mxu0
    %v394 = vadd.f32 %v36, %v393
    %395 = vdwg.mxu0
    %396 = vmatprep.subr.mxu0 %v28
    %397 = vmatpush1.msra.mxu0 %v27
    %398 = vmatprep.subr.mxu0 0.0
    %399 = vmatpush1.msra.mxu0 0.0
    %400 = vmatprep.subr.mxu0 0.0
    %401 = vmatpush1.msra.mxu0 0.0
    %402 = vmatprep.subr.mxu0 0.0
    %403 = vmatpush1.msra.mxu0 0.0
    %404 = vmatprep.subr.mxu0 0.0
    %405 = vmatpush1.msra.mxu0 0.0
    %406 = vmatprep.subr.mxu0 0.0
    %407 = vmatpush1.msra.mxu0 0.0
    %408 = vmatprep.subr.mxu0 0.0
    %409 = vmatpush1.msra.mxu0 0.0
    %410 = vmatprep.subr.mxu0 0.0
    %411 = vmatpush1.msra.mxu0 0.0
    %412 = vmatprep.subr.mxu0 0.0
    %413 = vmatpush1.msra.mxu0 0.0
    %414 = vmatprep.subr.mxu0 0.0
    %415 = vmatpush1.msra.mxu0 0.0
    %416 = vmatprep.subr.mxu0 0.0
    %417 = vmatpush1.msra.mxu0 0.0
    %418 = vmatprep.subr.mxu0 0.0
    %419 = vmatpush1.msra.mxu0 0.0
    %420 = vmatprep.subr.mxu0 0.0
    %421 = vmatpush1.msra.mxu0 0.0
    %422 = vmatprep.subr.mxu0 0.0
    %423 = vmatpush1.msra.mxu0 0.0
    %424 = vmatprep.subr.mxu0 0.0
    %425 = vmatpush1.msra.mxu0 0.0
    %426 = vmatprep.subr.mxu0 0.0
    %427 = vmatpush1.msra.mxu0 0.0
    %428 = vmatprep.subr.mxu0 0.0
    %429 = vmatpush1.msra.mxu0 0.0
    %430 = vmatprep.subr.mxu0 0.0
    %431 = vmatpush1.msra.mxu0 0.0
    %432 = vmatprep.subr.mxu0 0.0
    %433 = vmatpush1.msra.mxu0 0.0
    %434 = vmatprep.subr.mxu0 0.0
    %435 = vmatpush1.msra.mxu0 0.0
    %436 = vmatprep.subr.mxu0 0.0
    %437 = vmatpush1.msra.mxu0 0.0
    %438 = vmatprep.subr.mxu0 0.0
    %439 = vmatpush1.msra.mxu0 0.0
    %440 = vmatprep.subr.mxu0 0.0
    %441 = vmatpush1.msra.mxu0 0.0
    %442 = vmatprep.subr.mxu0 0.0
    %443 = vmatpush1.msra.mxu0 0.0
    %444 = vmatprep.subr.mxu0 0.0
    %445 = vmatpush1.msra.mxu0 0.0
    %446 = vmatprep.subr.mxu0 0.0
    %447 = vmatpush1.msra.mxu0 0.0
    %448 = vmatprep.subr.mxu0 0.0
    %449 = vmatpush1.msra.mxu0 0.0
    %450 = vmatprep.subr.mxu0 0.0
    %451 = vmatpush1.msra.mxu0 0.0
    %452 = vmatprep.subr.mxu0 0.0
    %453 = vmatpush1.msra.mxu0 0.0
    %454 = vmatprep.subr.mxu0 0.0
    %455 = vmatpush1.msra.mxu0 0.0
    %456 = vmatprep.subr.mxu0 0.0
    %457 = vmatpush1.msra.mxu0 0.0
    %458 = vmatprep.subr.mxu0 0.0
    %459 = vmatpush1.msra.mxu0 0.0
    %460 = vmatprep.mubr.f32.mxu0 0.0
    %461 = vmatmul.mubr.f32.gmra.mrb[0].mxu0 %v39
    %v462 = vpop.f32.mrb[0].mxu0
    %v463 = vadd.f32 %v36, %v462
    %v464 = vpop.f32.mrb[0].mxu0
    %v465 = vadd.f32 %v36, %v464
    %466 = vdwg.mxu0
    %467 = vmatprep.subr.mxu0 %v30
    %468 = vmatpush1.msra.mxu0 %v29
    %469 = vmatprep.subr.mxu0 0.0
    %470 = vmatpush1.msra.mxu0 0.0
    %471 = vmatprep.subr.mxu0 0.0
    %472 = vmatpush1.msra.mxu0 0.0
    %473 = vmatprep.subr.mxu0 0.0
    %474 = vmatpush1.msra.mxu0 0.0
    %475 = vmatprep.subr.mxu0 0.0
    %476 = vmatpush1.msra.mxu0 0.0
    %477 = vmatprep.subr.mxu0 0.0
    %478 = vmatpush1.msra.mxu0 0.0
    %479 = vmatprep.subr.mxu0 0.0
    %480 = vmatpush1.msra.mxu0 0.0
    %481 = vmatprep.subr.mxu0 0.0
    %482 = vmatpush1.msra.mxu0 0.0
    %483 = vmatprep.subr.mxu0 0.0
    %484 = vmatpush1.msra.mxu0 0.0
    %485 = vmatprep.subr.mxu0 0.0
    %486 = vmatpush1.msra.mxu0 0.0
    %487 = vmatprep.subr.mxu0 0.0
    %488 = vmatpush1.msra.mxu0 0.0
    %489 = vmatprep.subr.mxu0 0.0
    %490 = vmatpush1.msra.mxu0 0.0
    %491 = vmatprep.subr.mxu0 0.0
    %492 = vmatpush1.msra.mxu0 0.0
    %493 = vmatprep.subr.mxu0 0.0
    %494 = vmatpush1.msra.mxu0 0.0
    %495 = vmatprep.subr.mxu0 0.0
    %496 = vmatpush1.msra.mxu0 0.0
    %497 = vmatprep.subr.mxu0 0.0
    %498 = vmatpush1.msra.mxu0 0.0
    %499 = vmatprep.subr.mxu0 0.0
    %500 = vmatpush1.msra.mxu0 0.0
    %501 = vmatprep.subr.mxu0 0.0
    %502 = vmatpush1.msra.mxu0 0.0
    %503 = vmatprep.subr.mxu0 0.0
    %504 = vmatpush1.msra.mxu0 0.0
    %505 = vmatprep.subr.mxu0 0.0
    %506 = vmatpush1.msra.mxu0 0.0
    %507 = vmatprep.subr.mxu0 0.0
    %508 = vmatpush1.msra.mxu0 0.0
    %509 = vmatprep.subr.mxu0 0.0
    %510 = vmatpush1.msra.mxu0 0.0
    %511 = vmatprep.subr.mxu0 0.0
    %512 = vmatpush1.msra.mxu0 0.0
    %513 = vmatprep.subr.mxu0 0.0
    %514 = vmatpush1.msra.mxu0 0.0
    %515 = vmatprep.subr.mxu0 0.0
    %516 = vmatpush1.msra.mxu0 0.0
    %517 = vmatprep.subr.mxu0 0.0
    %518 = vmatpush1.msra.mxu0 0.0
    %519 = vmatprep.subr.mxu0 0.0
    %520 = vmatpush1.msra.mxu0 0.0
    %521 = vmatprep.subr.mxu0 0.0
    %522 = vmatpush1.msra.mxu0 0.0
    %523 = vmatprep.subr.mxu0 0.0
    %524 = vmatpush1.msra.mxu0 0.0
    %525 = vmatprep.subr.mxu0 0.0
    %526 = vmatpush1.msra.mxu0 0.0
    %527 = vmatprep.subr.mxu0 0.0
    %528 = vmatpush1.msra.mxu0 0.0
    %529 = vmatprep.subr.mxu0 0.0
    %530 = vmatpush1.msra.mxu0 0.0
    %531 = vmatprep.mubr.f32.mxu0 0.0
    %532 = vmatmul.mubr.f32.gmra.mrb[0].mxu0 %v39
    %v533 = vpop.f32.mrb[0].mxu0
    %v534 = vadd.f32 %v36, %v533
    %v535 = vpop.f32.mrb[0].mxu0
    %v536 = vadd.f32 %v36, %v535
    %537 = vdwg.mxu0
    %538 = vmatprep.subr.mxu0 %v32
    %539 = vmatpush1.msra.mxu0 %v31
    %540 = vmatprep.subr.mxu0 0.0
    %541 = vmatpush1.msra.mxu0 0.0
    %542 = vmatprep.subr.mxu0 0.0
    %543 = vmatpush1.msra.mxu0 0.0
    %544 = vmatprep.subr.mxu0 0.0
    %545 = vmatpush1.msra.mxu0 0.0
    %546 = vmatprep.subr.mxu0 0.0
    %547 = vmatpush1.msra.mxu0 0.0
    %548 = vmatprep.subr.mxu0 0.0
    %549 = vmatpush1.msra.mxu0 0.0
    %550 = vmatprep.subr.mxu0 0.0
    %551 = vmatpush1.msra.mxu0 0.0
    %552 = vmatprep.subr.mxu0 0.0
    %553 = vmatpush1.msra.mxu0 0.0
    %554 = vmatprep.subr.mxu0 0.0
    %555 = vmatpush1.msra.mxu0 0.0
    %556 = vmatprep.subr.mxu0 0.0
    %557 = vmatpush1.msra.mxu0 0.0
    %558 = vmatprep.subr.mxu0 0.0
    %559 = vmatpush1.msra.mxu0 0.0
    %560 = vmatprep.subr.mxu0 0.0
    %561 = vmatpush1.msra.mxu0 0.0
    %562 = vmatprep.subr.mxu0 0.0
    %563 = vmatpush1.msra.mxu0 0.0
    %564 = vmatprep.subr.mxu0 0.0
    %565 = vmatpush1.msra.mxu0 0.0
    %566 = vmatprep.subr.mxu0 0.0
    %567 = vmatpush1.msra.mxu0 0.0
    %568 = vmatprep.subr.mxu0 0.0
    %569 = vmatpush1.msra.mxu0 0.0
    %570 = vmatprep.subr.mxu0 0.0
    %571 = vmatpush1.msra.mxu0 0.0
    %572 = vmatprep.subr.mxu0 0.0
    %573 = vmatpush1.msra.mxu0 0.0
    %574 = vmatprep.subr.mxu0 0.0
    %575 = vmatpush1.msra.mxu0 0.0
    %576 = vmatprep.subr.mxu0 0.0
    %577 = vmatpush1.msra.mxu0 0.0
    %578 = vmatprep.subr.mxu0 0.0
    %579 = vmatpush1.msra.mxu0 0.0
    %580 = vmatprep.subr.mxu0 0.0
    %581 = vmatpush1.msra.mxu0 0.0
    %582 = vmatprep.subr.mxu0 0.0
    %583 = vmatpush1.msra.mxu0 0.0
    %584 = vmatprep.subr.mxu0 0.0
    %585 = vmatpush1.msra.mxu0 0.0
    %586 = vmatprep.subr.mxu0 0.0
    %587 = vmatpush1.msra.mxu0 0.0
    %588 = vmatprep.subr.mxu0 0.0
    %589 = vmatpush1.msra.mxu0 0.0
    %590 = vmatprep.subr.mxu0 0.0
    %591 = vmatpush1.msra.mxu0 0.0
    %592 = vmatprep.subr.mxu0 0.0
    %593 = vmatpush1.msra.mxu0 0.0
    %594 = vmatprep.subr.mxu0 0.0
    %595 = vmatpush1.msra.mxu0 0.0
    %596 = vmatprep.subr.mxu0 0.0
    %597 = vmatpush1.msra.mxu0 0.0
    %598 = vmatprep.subr.mxu0 0.0
    %599 = vmatpush1.msra.mxu0 0.0
    %600 = vmatprep.subr.mxu0 0.0
    %601 = vmatpush1.msra.mxu0 0.0
    %602 = vmatprep.mubr.f32.mxu0 0.0
    %603 = vmatmul.mubr.f32.gmra.mrb[0].mxu0 %v39
    %v604 = vpop.f32.mrb[0].mxu0
    %v605 = vadd.f32 %v36, %v604
    %v606 = vpop.f32.mrb[0].mxu0
    %v607 = vadd.f32 %v36, %v606
    %608 = vdwg.mxu0
    %v609 = vtanh.pop %v108
    %v610 = vtanh.pop %v110
    %v611 = vtanh.pop %v179
    %v612 = vtanh.pop %v181
    %v613 = vtanh.pop %v250
    %v614 = vtanh.pop %v252
    %v615 = vtanh.pop %v321
    %v616 = vtanh.pop %v323
    %v617 = vtanh.pop %v392
    %v618 = vtanh.pop %v394
    %v619 = vtanh.pop %v463
    %v620 = vtanh.pop %v465
    %v621 = vtanh.pop %v534
    %v622 = vtanh.pop %v536
    %v623 = vtanh.pop %v605
    %v624 = vtanh.pop %v607
    %625 = vset.pattern.permute.xlu0 9
    %626 = vperm.xlu0 %625, %v16
    %v627 = vpop.permute.xlu0 %626
    %v629 = vmul.f32 %v609, %v627
    %v630 = vmul.f32 %v610, %v627
    %v631 = vmul.f32 %v611, %v627
    %v632 = vmul.f32 %v612, %v627
    %v633 = vmul.f32 %v613, %v627
    %v634 = vmul.f32 %v614, %v627
    %v635 = vmul.f32 %v615, %v627
    %v636 = vmul.f32 %v616, %v627
    %v637 = vmul.f32 %v617, %v627
    %v638 = vmul.f32 %v618, %v627
    %v639 = vmul.f32 %v619, %v627
    %v640 = vmul.f32 %v620, %v627
    %v641 = vmul.f32 %v621, %v627
    %v642 = vmul.f32 %v622, %v627
    %v643 = vmul.f32 %v623, %v627
    %v644 = vmul.f32 %v624, %v627
    %v645 = vrot.slane %v629, 4
    %v646 = vadd.f32 %v629, %v645
    %v647 = vrot.slane %v646, 2
    %v648 = vadd.f32 %v646, %v647
    %v649 = vrot.slane %v648, 1
    %v650 = vadd.f32 %v648, %v649
    %v651 = vrot.slane %v630, 4
    %v652 = vadd.f32 %v630, %v651
    %v653 = vrot.slane %v652, 2
    %v654 = vadd.f32 %v652, %v653
    %v655 = vrot.slane %v654, 1
    %v656 = vadd.f32 %v654, %v655
    %v657 = vrot.slane %v631, 4
    %v658 = vadd.f32 %v631, %v657
    %v659 = vrot.slane %v658, 2
    %v660 = vadd.f32 %v658, %v659
    %v661 = vrot.slane %v660, 1
    %v662 = vadd.f32 %v660, %v661
    %v663 = vrot.slane %v632, 4
    %v664 = vadd.f32 %v632, %v663
    %v665 = vrot.slane %v664, 2
    %v666 = vadd.f32 %v664, %v665
    %v667 = vrot.slane %v666, 1
    %v668 = vadd.f32 %v666, %v667
    %v669 = vrot.slane %v633, 4
    %v670 = vadd.f32 %v633, %v669
    %v671 = vrot.slane %v670, 2
    %v672 = vadd.f32 %v670, %v671
    %v673 = vrot.slane %v672, 1
    %v674 = vadd.f32 %v672, %v673
    %v675 = vrot.slane %v634, 4
    %v676 = vadd.f32 %v634, %v675
    %v677 = vrot.slane %v676, 2
    %v678 = vadd.f32 %v676, %v677
    %v679 = vrot.slane %v678, 1
    %v680 = vadd.f32 %v678, %v679
    %v681 = vrot.slane %v635, 4
    %v682 = vadd.f32 %v635, %v681
    %v683 = vrot.slane %v682, 2
    %v684 = vadd.f32 %v682, %v683
    %v685 = vrot.slane %v684, 1
    %v686 = vadd.f32 %v684, %v685
    %v687 = vrot.slane %v636, 4
    %v688 = vadd.f32 %v636, %v687
    %v689 = vrot.slane %v688, 2
    %v690 = vadd.f32 %v688, %v689
    %v691 = vrot.slane %v690, 1
    %v692 = vadd.f32 %v690, %v691
    %v693 = vrot.slane %v637, 4
    %v694 = vadd.f32 %v637, %v693
    %v695 = vrot.slane %v694, 2
    %v696 = vadd.f32 %v694, %v695
    %v697 = vrot.slane %v696, 1
    %v698 = vadd.f32 %v696, %v697
    %v699 = vrot.slane %v638, 4
    %v700 = vadd.f32 %v638, %v699
    %v701 = vrot.slane %v700, 2
    %v702 = vadd.f32 %v700, %v701
    %v703 = vrot.slane %v702, 1
    %v704 = vadd.f32 %v702, %v703
    %v705 = vrot.slane %v639, 4
    %v706 = vadd.f32 %v639, %v705
    %v707 = vrot.slane %v706, 2
    %v708 = vadd.f32 %v706, %v707
    %v709 = vrot.slane %v708, 1
    %v710 = vadd.f32 %v708, %v709
    %v711 = vrot.slane %v640, 4
    %v712 = vadd.f32 %v640, %v711
    %v713 = vrot.slane %v712, 2
    %v714 = vadd.f32 %v712, %v713
    %v715 = vrot.slane %v714, 1
    %v716 = vadd.f32 %v714, %v715
    %v717 = vrot.slane %v641, 4
    %v718 = vadd.f32 %v641, %v717
    %v719 = vrot.slane %v718, 2
    %v720 = vadd.f32 %v718, %v719
    %v721 = vrot.slane %v720, 1
    %v722 = vadd.f32 %v720, %v721
    %v723 = vrot.slane %v642, 4
    %v724 = vadd.f32 %v642, %v723
    %v725 = vrot.slane %v724, 2
    %v726 = vadd.f32 %v724, %v725
    %v727 = vrot.slane %v726, 1
    %v728 = vadd.f32 %v726, %v727
    %v729 = vrot.slane %v643, 4
    %v730 = vadd.f32 %v643, %v729
    %v731 = vrot.slane %v730, 2
    %v732 = vadd.f32 %v730, %v731
    %v733 = vrot.slane %v732, 1
    %v734 = vadd.f32 %v732, %v733
    %v735 = vrot.slane %v644, 4
    %v736 = vadd.f32 %v644, %v735
    %v737 = vrot.slane %v736, 2
    %v738 = vadd.f32 %v736, %v737
    %v739 = vrot.slane %v738, 1
    %v740 = vadd.f32 %v738, %v739
    %s741 = sld [smem:[#allocation2]]
    %v742 = vstv %s741
    %v743 = vadd.f32 %v650, %v742
    %v744 = vadd.f32 %v656, %v742
    %v745 = vadd.f32 %v662, %v742
    %v746 = vadd.f32 %v668, %v742
    %v747 = vadd.f32 %v674, %v742
    %v748 = vadd.f32 %v680, %v742
    %v749 = vadd.f32 %v686, %v742
    %v750 = vadd.f32 %v692, %v742
    %v751 = vadd.f32 %v698, %v742
    %v752 = vadd.f32 %v704, %v742
    %v753 = vadd.f32 %v710, %v742
    %v754 = vadd.f32 %v716, %v742
    %v755 = vadd.f32 %v722, %v742
    %v756 = vadd.f32 %v728, %v742
    %v757 = vadd.f32 %v734, %v742
    %v758 = vadd.f32 %v740, %v742
    %v759 = vxor.u32 %v743, 2147483648
    %v760 = vxor.u32 %v744, 2147483648
    %v761 = vxor.u32 %v745, 2147483648
    %v762 = vxor.u32 %v746, 2147483648
    %v763 = vxor.u32 %v747, 2147483648
    %v764 = vxor.u32 %v748, 2147483648
    %v765 = vxor.u32 %v749, 2147483648
    %v766 = vxor.u32 %v750, 2147483648
    %v767 = vxor.u32 %v751, 2147483648
    %v768 = vxor.u32 %v752, 2147483648
    %v769 = vxor.u32 %v753, 2147483648
    %v770 = vxor.u32 %v754, 2147483648
    %v771 = vxor.u32 %v755, 2147483648
    %v772 = vxor.u32 %v756, 2147483648
    %v773 = vxor.u32 %v757, 2147483648
    %v774 = vxor.u32 %v758, 2147483648
    %v775 = vmul.f32 %v759, 1.442695
    %v776 = vpow.pop %v775
    %v777 = vmul.f32 %v760, 1.442695
    %v778 = vpow.pop %v777
    %v779 = vmul.f32 %v761, 1.442695
    %v780 = vpow.pop %v779
    %v781 = vmul.f32 %v762, 1.442695
    %v782 = vpow.pop %v781
    %v783 = vmul.f32 %v763, 1.442695
    %v784 = vpow.pop %v783
    %v785 = vmul.f32 %v764, 1.442695
    %v786 = vpow.pop %v785
    %v787 = vmul.f32 %v765, 1.442695
    %v788 = vpow.pop %v787
    %v789 = vmul.f32 %v766, 1.442695
    %v790 = vpow.pop %v789
    %v791 = vmul.f32 %v767, 1.442695
    %v792 = vpow.pop %v791
    %v793 = vmul.f32 %v768, 1.442695
    %v794 = vpow.pop %v793
    %v795 = vmul.f32 %v769, 1.442695
    %v796 = vpow.pop %v795
    %v797 = vmul.f32 %v770, 1.442695
    %v798 = vpow.pop %v797
    %v799 = vmul.f32 %v771, 1.442695
    %v800 = vpow.pop %v799
    %v801 = vmul.f32 %v772, 1.442695
    %v802 = vpow.pop %v801
    %v803 = vmul.f32 %v773, 1.442695
    %v804 = vpow.pop %v803
    %v805 = vmul.f32 %v774, 1.442695
    %v806 = vpow.pop %v805
    %v807 = vadd.f32 %v776, 1.0
    %v808 = vadd.f32 %v778, 1.0
    %v809 = vadd.f32 %v780, 1.0
    %v810 = vadd.f32 %v782, 1.0
    %v811 = vadd.f32 %v784, 1.0
    %v812 = vadd.f32 %v786, 1.0
    %v813 = vadd.f32 %v788, 1.0
    %v814 = vadd.f32 %v790, 1.0
    %v815 = vadd.f32 %v792, 1.0
    %v816 = vadd.f32 %v794, 1.0
    %v817 = vadd.f32 %v796, 1.0
    %v818 = vadd.f32 %v798, 1.0
    %v819 = vadd.f32 %v800, 1.0
    %v820 = vadd.f32 %v802, 1.0
    %v821 = vadd.f32 %v804, 1.0
    %v822 = vadd.f32 %v806, 1.0
    %v823 = vrcp.pop %v807
    %v824 = vmul.f32 1.0, %v823
    %v825 = vrcp.pop %v808
    %v826 = vmul.f32 1.0, %v825
    %v827 = vrcp.pop %v809
    %v828 = vmul.f32 1.0, %v827
    %v829 = vrcp.pop %v810
    %v830 = vmul.f32 1.0, %v829
    %v831 = vrcp.pop %v811
    %v832 = vmul.f32 1.0, %v831
    %v833 = vrcp.pop %v812
    %v834 = vmul.f32 1.0, %v833
    %v835 = vrcp.pop %v813
    %v836 = vmul.f32 1.0, %v835
    %v837 = vrcp.pop %v814
    %v838 = vmul.f32 1.0, %v837
    %v839 = vrcp.pop %v815
    %v840 = vmul.f32 1.0, %v839
    %v841 = vrcp.pop %v816
    %v842 = vmul.f32 1.0, %v841
    %v843 = vrcp.pop %v817
    %v844 = vmul.f32 1.0, %v843
    %v845 = vrcp.pop %v818
    %v846 = vmul.f32 1.0, %v845
    %v847 = vrcp.pop %v819
    %v848 = vmul.f32 1.0, %v847
    %v849 = vrcp.pop %v820
    %v850 = vmul.f32 1.0, %v849
    %v851 = vrcp.pop %v821
    %v852 = vmul.f32 1.0, %v851
    %v853 = vrcp.pop %v822
    %v854 = vmul.f32 1.0, %v853
    %v871 = vcombine.low %v824, %v826
    %v872 = vcombine.low %v828, %v830
    %v873 = vcombine.low %v832, %v834
    %v874 = vcombine.low %v836, %v838
    %v876 = vunpack.c.l.s4 1966171168
    %v877 = vunpack.c.0.s8 %v876
    %v878 = vlaneseq
    %v879 = vshrl.u32 %v878, 7
    %v880 = vsub.s32 %v877, %v879
    %v881 = vrot.slane %v871, %v880
    %v883 = vunpack.c.l.s4 1966171168
    %v884 = vunpack.c.0.s8 %v883
    %v885 = vlaneseq
    %v886 = vshrl.u32 %v885, 7
    %v887 = vsub.s32 %v884, %v886
    %v888 = vrot.slane %v872, %v887
    %v890 = vunpack.c.l.s4 1966171168
    %v891 = vunpack.c.0.s8 %v890
    %v892 = vlaneseq
    %v893 = vshrl.u32 %v892, 7
    %v894 = vsub.s32 %v891, %v893
    %v895 = vrot.slane %v873, %v894
    %v897 = vunpack.c.l.s4 1966171168
    %v898 = vunpack.c.0.s8 %v897
    %v899 = vlaneseq
    %v900 = vshrl.u32 %v899, 7
    %v901 = vsub.s32 %v898, %v900
    %v902 = vrot.slane %v874, %v901
    %v903 = vcombine.low %v881, %v888
    %v904 = vcombine.low %v895, %v902
    %v906 = vunpack.c.l.s4 1966171168
    %v907 = vunpack.c.0.s8 %v906
    %v908 = vlaneseq
    %v909 = vshrl.u32 %v908, 7
    %v910 = vsub.s32 %v907, %v909
    %v911 = vrot.slane %v903, %v910
    %v913 = vunpack.c.l.s4 1966171168
    %v914 = vunpack.c.0.s8 %v913
    %v915 = vlaneseq
    %v916 = vshrl.u32 %v915, 7
    %v917 = vsub.s32 %v914, %v916
    %v918 = vrot.slane %v904, %v917
    %v919 = vcombine.low %v911, %v918
    %v920 = vcombine.low %v840, %v842
    %v921 = vcombine.low %v844, %v846
    %v922 = vcombine.low %v848, %v850
    %v923 = vcombine.low %v852, %v854
    %v925 = vunpack.c.l.s4 1966171168
    %v926 = vunpack.c.0.s8 %v925
    %v927 = vlaneseq
    %v928 = vshrl.u32 %v927, 7
    %v929 = vsub.s32 %v926, %v928
    %v930 = vrot.slane %v920, %v929
    %v932 = vunpack.c.l.s4 1966171168
    %v933 = vunpack.c.0.s8 %v932
    %v934 = vlaneseq
    %v935 = vshrl.u32 %v934, 7
    %v936 = vsub.s32 %v933, %v935
    %v937 = vrot.slane %v921, %v936
    %v939 = vunpack.c.l.s4 1966171168
    %v940 = vunpack.c.0.s8 %v939
    %v941 = vlaneseq
    %v942 = vshrl.u32 %v941, 7
    %v943 = vsub.s32 %v940, %v942
    %v944 = vrot.slane %v922, %v943
    %v946 = vunpack.c.l.s4 1966171168
    %v947 = vunpack.c.0.s8 %v946
    %v948 = vlaneseq
    %v949 = vshrl.u32 %v948, 7
    %v950 = vsub.s32 %v947, %v949
    %v951 = vrot.slane %v923, %v950
    %v952 = vcombine.low %v930, %v937
    %v953 = vcombine.low %v944, %v951
    %v955 = vunpack.c.l.s4 1966171168
    %v956 = vunpack.c.0.s8 %v955
    %v957 = vlaneseq
    %v958 = vshrl.u32 %v957, 7
    %v959 = vsub.s32 %v956, %v958
    %v960 = vrot.slane %v952, %v959
    %v962 = vunpack.c.l.s4 1966171168
    %v963 = vunpack.c.0.s8 %v962
    %v964 = vlaneseq
    %v965 = vshrl.u32 %v964, 7
    %v966 = vsub.s32 %v963, %v965
    %v967 = vrot.slane %v953, %v966
    %v968 = vcombine.low %v960, %v967
    %971 = vst [vmem:[#allocation3] sm:$0xff] %v919
    %972 = vst [vmem:[#allocation3 + $0x8] sm:$0xff] %v968
    // Predicated region
    $region14: #{pytorch_nn_forward.1} parent=1 // pred_check
      _
    $region15: #{pytorch_nn_forward.1} parent=1 // pred_check_branch
      %974 = sbr.rel (0) target = $region17
    $region16: #{pytorch_nn_forward.1} parent=1 // pred_region
      %s976 = ssub.s32 256, 256
      %977 = vsyncadd [#allocation4], %s976
      %s979 = sshll.u32 [#allocation3], 4
      %s980 = int_to_ptr.vmem [resolvable:$true] %s979
      %982 = dma.vmem_to_hbm [thread:$0]  %s980, 256, %s3, [#allocation4]
    $region17: #{pytorch_nn_forward.1} parent=1 // pred_fallthru
      _
    // Predicated region
    $region18: #{pytorch_nn_forward.1} parent=1 // pred_check
      _
    $region19: #{pytorch_nn_forward.1} parent=1 // pred_check_branch
      %984 = sbr.rel (0) target = $region21
    $region20: #{pytorch_nn_forward.1} parent=1 // pred_region
      %985 = dma.done [#allocation4], 256
    $region21: #{pytorch_nn_forward.1} parent=1 // pred_fallthru
      _
    %986 = vsyncpa [#allocation4], 1

</llo_original>
